<compile_context>
chip_gen: v5e
topology: v5e:2x2
jax: 0.10.0
libtpu: 0.0.40
codegen_flags: <defaults>
</compile_context>

<pallas_src>
import functools

import jax
import jax.numpy as jnp
from jax import lax
from jax.experimental import pallas as pl
from jax.experimental.pallas import tpu as pltpu


def _round_up(x, m):
    return (x + m - 1) // m * m


def br_kernel(x_ref, mask_ref, w1_ref, b1_ref, w2_ref, b2_ref, out_ref,
              *, H, W, C, C_pad):
    """One batch element: out = x + conv2(relu(conv1(x))).

    x_ref:    (C, H*W)         input tile, also the residual source
    mask_ref: (9, H*W) f32     {0,1} border masks, one row per 3x3 tap
    w*_ref:   (C_pad, 9*C_pad) packed conv weights (tap-major, ci-minor cols)
    b*_ref:   (C_pad, 1)       biases
    out_ref:  (C, H*W)
    """
    HW = H * W

    x = x_ref[...].astype(jnp.float32)                         # (C, HW)
    # Pad channels to a sublane multiple so every im2col piece is vreg
    # aligned; the padded rows only ever hit all-zero weight columns.
    if C_pad > C:
        x_p = jnp.concatenate(
            [x, jnp.zeros((C_pad - C, HW), jnp.float32)], axis=0)
    else:
        x_p = x

    masks = mask_ref[...]                                      # (9, HW)

    # Static tap table: tap = dh*3 + dw; a spatial offset (dh-1, dw-1) is a
    # rotation by -((dh-1)*W + (dw-1)) of the row-major flattened lane axis.
    taps = []
    for dh in range(3):
        for dw in range(3):
            oh, ow = dh - 1, dw - 1
            taps.append((dh * 3 + dw, (-(oh * W + ow)) % HW))

    def conv3x3(inp, w_ref, b_ref):
        # inp: (C_pad, HW) f32 -> conv + bias, (C_pad, HW) f32.
        pieces = []
        for tap, shift in taps:
            shifted = pltpu.roll(inp, shift=shift, axis=1) if shift else inp
            # Zero positions whose 3x3 neighbour fell outside the image
            # (the lane rotation wrapped them around).
            pieces.append(shifted * masks[tap:tap + 1, :])
        pmat = jnp.concatenate(pieces, axis=0)                 # (9*C_pad, HW)
        acc = jnp.dot(w_ref[...], pmat,
                      preferred_element_type=jnp.float32)      # (C_pad, HW)
        return acc + b_ref[...]                                # lane-bcast bias

    y = jnp.maximum(conv3x3(x_p, w1_ref, b1_ref), 0.0)         # relu(conv1(x))
    y = conv3x3(y, w2_ref, b2_ref)                             # conv2(...)

    out_ref[...] = (x + y[:C, :]).astype(out_ref.dtype)        # residual add


def _pack_conv_weight(w_hwio, C, C_pad):
    """(3,3,Cin,Cout) HWIO -> (C_pad, 9*C_pad); col idx = (dh*3+dw)*C_pad+ci."""
    w = jnp.transpose(w_hwio, (3, 0, 1, 2))                    # (Cout,3,3,Cin)
    w = jnp.pad(w, ((0, C_pad - C), (0, 0), (0, 0), (0, C_pad - C)))
    return w.reshape(C_pad, 9 * C_pad).astype(jnp.float32)


def _tap_masks(H, W):
    """(9, H*W) f32 masks: 1 where the 3x3 neighbour lies inside the image."""
    pos = jnp.arange(H * W, dtype=jnp.int32)
    h, w = pos // W, pos % W
    rows = []
    for dh in range(3):
        for dw in range(3):
            oh, ow = dh - 1, dw - 1
            m = (h + oh >= 0) & (h + oh < H) & (w + ow >= 0) & (w + ow < W)
            rows.append(m.astype(jnp.float32))
    return jnp.stack(rows, axis=0)


def br_forward(x_nchw, w1, b1, w2, b2):
    """x_nchw: (N, C, H, W). w1/w2: (3,3,Cin,Cout) HWIO. b1/b2: (C,)."""
    N, C, H, W = x_nchw.shape
    HW = H * W
    C_pad = _round_up(C, 8)

    x_flat = x_nchw.reshape(N, C, HW)                          # free reshape
    masks = _tap_masks(H, W)
    w1f = _pack_conv_weight(w1, C, C_pad)
    w2f = _pack_conv_weight(w2, C, C_pad)
    b1c = jnp.pad(b1, (0, C_pad - C)).reshape(C_pad, 1).astype(jnp.float32)
    b2c = jnp.pad(b2, (0, C_pad - C)).reshape(C_pad, 1).astype(jnp.float32)

    kernel = functools.partial(br_kernel, H=H, W=W, C=C, C_pad=C_pad)

    out_flat = pl.pallas_call(
        kernel,
        out_shape=jax.ShapeDtypeStruct((N, C, HW), x_nchw.dtype),
        grid_spec=pltpu.PrefetchScalarGridSpec(
            num_scalar_prefetch=0,
            grid=(N,),
            in_specs=[
                pl.BlockSpec((pl.Squeezed(), C, HW), lambda n: (n, 0, 0)),
                pl.BlockSpec((9, HW), lambda n: (0, 0)),
                pl.BlockSpec((C_pad, 9 * C_pad), lambda n: (0, 0)),
                pl.BlockSpec((C_pad, 1), lambda n: (0, 0)),
                pl.BlockSpec((C_pad, 9 * C_pad), lambda n: (0, 0)),
                pl.BlockSpec((C_pad, 1), lambda n: (0, 0)),
            ],
            out_specs=pl.BlockSpec((pl.Squeezed(), C, HW),
                                   lambda n: (n, 0, 0)),
        ),
        # Batch axis is embarrassingly parallel -> v7x shards it over its two
        # TensorCores; harmless on single-TC v5e/v6e. VMEM use here is tiny,
        # so the scoped default limit is plenty (raise it for large H*W).
        compiler_params=pltpu.CompilerParams(
            dimension_semantics=("parallel",)),
    )(x_flat, masks, w1f, b1c, w2f, b2c)

    return out_flat.reshape(N, C, H, W)


def br_reference(x_nchw, w1, b1, w2, b2):
    """Pure-JAX reference using lax.conv_general_dilated."""
    x = jnp.transpose(x_nchw, (0, 2, 3, 1))
    dn = ("NHWC", "HWIO", "NHWC")
    y = lax.conv_general_dilated(x, w1, (1, 1), "SAME", dimension_numbers=dn)
    y = jnp.maximum(y + b1[None, None, None, :], 0.0)
    y = lax.conv_general_dilated(y, w2, (1, 1), "SAME", dimension_numbers=dn)
    y = y + b2[None, None, None, :]
    return jnp.transpose(x + y, (0, 3, 1, 2))


if __name__ == "__main__":
    N, C, H, W = 2, 4, 16, 16
    key = jax.random.PRNGKey(0)
    kx, k1, kb1, k2, kb2 = jax.random.split(key, 5)

    x = jax.random.normal(kx, (N, C, H, W), jnp.float32)
    # deterministic synthetic parameters (HWIO layout for weights)
    w1 = jax.random.normal(k1, (3, 3, C, C), jnp.float32) * 0.1
    b1 = jax.random.normal(kb1, (C,), jnp.float32) * 0.1
    w2 = jax.random.normal(k2, (3, 3, C, C), jnp.float32) * 0.1
    b2 = jax.random.normal(kb2, (C,), jnp.float32) * 0.1

    out = jax.block_until_ready(br_forward(x, w1, b1, w2, b2))
    ref = jax.block_until_ready(br_reference(x, w1, b1, w2, b2))

    assert out.shape == (N, C, H, W)
    err = float(jnp.max(jnp.abs(out - ref)))
    assert jnp.allclose(out, ref, atol=1e-4, rtol=1e-4), f"max err {err}"
    print("KERNEL_OK")
</pallas_src>

<mosaic_0001>
module attributes {stable_mosaic.version = 11 : i64} {
  func.func @br_kernel(%arg0: i32, %arg1: memref<1x4x256xf32, #tpu.memory_space<vmem>>, %arg2: memref<9x256xf32, #tpu.memory_space<vmem>>, %arg3: memref<8x72xf32, #tpu.memory_space<vmem>>, %arg4: memref<8x1xf32, #tpu.memory_space<vmem>>, %arg5: memref<8x72xf32, #tpu.memory_space<vmem>>, %arg6: memref<8x1xf32, #tpu.memory_space<vmem>>, %arg7: memref<1x4x256xf32, #tpu.memory_space<vmem>>) attributes {dimension_semantics = [#tpu.dimension_semantics<parallel>], iteration_bounds = array<i64: 2>, scalar_prefetch = 0 : i64, scratch_operands = 0 : i64, tpu.core_type = #tpu.core_type<tc>, window_params = [{transform_indices = @transform_0, window_bounds = array<i64: 1, 4, 256>}, {pipeline_mode = #tpu.pipeline_mode<synchronous>, transform_indices = @transform_1, window_bounds = array<i64: 9, 256>}, {pipeline_mode = #tpu.pipeline_mode<synchronous>, transform_indices = @transform_2, window_bounds = array<i64: 8, 72>}, {pipeline_mode = #tpu.pipeline_mode<synchronous>, transform_indices = @transform_3, window_bounds = array<i64: 8, 1>}, {pipeline_mode = #tpu.pipeline_mode<synchronous>, transform_indices = @transform_4, window_bounds = array<i64: 8, 72>}, {pipeline_mode = #tpu.pipeline_mode<synchronous>, transform_indices = @transform_5, window_bounds = array<i64: 8, 1>}, {transform_indices = @transform_6, window_bounds = array<i64: 1, 4, 256>}]} {
    %c0 = arith.constant 0 : index
    %c0_0 = arith.constant 0 : index
    %c0_1 = arith.constant 0 : index
    %0 = vector.load %arg1[%c0, %c0_0, %c0_1] : memref<1x4x256xf32, #tpu.memory_space<vmem>>, vector<1x4x256xf32>
    %1 = vector.shape_cast %0 : vector<1x4x256xf32> to vector<4x256xf32>
    %cst = arith.constant 0.000000e+00 : f32
    %2 = vector.broadcast %cst : f32 to vector<4x256xf32>
    %3 = tpu.concatenate %1, %2 in 0 : vector<4x256xf32>, vector<4x256xf32> -> vector<8x256xf32>
    %c0_2 = arith.constant 0 : index
    %c0_3 = arith.constant 0 : index
    %4 = vector.load %arg2[%c0_2, %c0_3] : memref<9x256xf32, #tpu.memory_space<vmem>>, vector<9x256xf32>
    %c17_i32 = arith.constant 17 : i32
    %5 = tpu.dynamic_rotate %3 by %c17_i32 dim 1 : vector<8x256xf32>, i32 -> vector<8x256xf32>
    %6 = vector.extract_strided_slice %4 {offsets = [0, 0], sizes = [1, 256], strides = [1, 1]} : vector<9x256xf32> to vector<1x256xf32>
    %7 = vector.broadcast %6 : vector<1x256xf32> to vector<8x256xf32>
    %8 = arith.mulf %5, %7 : vector<8x256xf32>
    %c16_i32 = arith.constant 16 : i32
    %9 = tpu.dynamic_rotate %3 by %c16_i32 dim 1 : vector<8x256xf32>, i32 -> vector<8x256xf32>
    %10 = vector.extract_strided_slice %4 {offsets = [1, 0], sizes = [1, 256], strides = [1, 1]} : vector<9x256xf32> to vector<1x256xf32>
    %11 = vector.broadcast %10 : vector<1x256xf32> to vector<8x256xf32>
    %12 = arith.mulf %9, %11 : vector<8x256xf32>
    %c15_i32 = arith.constant 15 : i32
    %13 = tpu.dynamic_rotate %3 by %c15_i32 dim 1 : vector<8x256xf32>, i32 -> vector<8x256xf32>
    %14 = vector.extract_strided_slice %4 {offsets = [2, 0], sizes = [1, 256], strides = [1, 1]} : vector<9x256xf32> to vector<1x256xf32>
    %15 = vector.broadcast %14 : vector<1x256xf32> to vector<8x256xf32>
    %16 = arith.mulf %13, %15 : vector<8x256xf32>
    %c1_i32 = arith.constant 1 : i32
    %17 = tpu.dynamic_rotate %3 by %c1_i32 dim 1 : vector<8x256xf32>, i32 -> vector<8x256xf32>
    %18 = vector.extract_strided_slice %4 {offsets = [3, 0], sizes = [1, 256], strides = [1, 1]} : vector<9x256xf32> to vector<1x256xf32>
    %19 = vector.broadcast %18 : vector<1x256xf32> to vector<8x256xf32>
    %20 = arith.mulf %17, %19 : vector<8x256xf32>
    %21 = vector.extract_strided_slice %4 {offsets = [4, 0], sizes = [1, 256], strides = [1, 1]} : vector<9x256xf32> to vector<1x256xf32>
    %22 = vector.broadcast %21 : vector<1x256xf32> to vector<8x256xf32>
    %23 = arith.mulf %3, %22 : vector<8x256xf32>
    %c255_i32 = arith.constant 255 : i32
    %24 = tpu.dynamic_rotate %3 by %c255_i32 dim 1 : vector<8x256xf32>, i32 -> vector<8x256xf32>
    %25 = vector.extract_strided_slice %4 {offsets = [5, 0], sizes = [1, 256], strides = [1, 1]} : vector<9x256xf32> to vector<1x256xf32>
    %26 = vector.broadcast %25 : vector<1x256xf32> to vector<8x256xf32>
    %27 = arith.mulf %24, %26 : vector<8x256xf32>
    %c241_i32 = arith.constant 241 : i32
    %28 = tpu.dynamic_rotate %3 by %c241_i32 dim 1 : vector<8x256xf32>, i32 -> vector<8x256xf32>
    %29 = vector.extract_strided_slice %4 {offsets = [6, 0], sizes = [1, 256], strides = [1, 1]} : vector<9x256xf32> to vector<1x256xf32>
    %30 = vector.broadcast %29 : vector<1x256xf32> to vector<8x256xf32>
    %31 = arith.mulf %28, %30 : vector<8x256xf32>
    %c240_i32 = arith.constant 240 : i32
    %32 = tpu.dynamic_rotate %3 by %c240_i32 dim 1 : vector<8x256xf32>, i32 -> vector<8x256xf32>
    %33 = vector.extract_strided_slice %4 {offsets = [7, 0], sizes = [1, 256], strides = [1, 1]} : vector<9x256xf32> to vector<1x256xf32>
    %34 = vector.broadcast %33 : vector<1x256xf32> to vector<8x256xf32>
    %35 = arith.mulf %32, %34 : vector<8x256xf32>
    %c239_i32 = arith.constant 239 : i32
    %36 = tpu.dynamic_rotate %3 by %c239_i32 dim 1 : vector<8x256xf32>, i32 -> vector<8x256xf32>
    %37 = vector.extract_strided_slice %4 {offsets = [8, 0], sizes = [1, 256], strides = [1, 1]} : vector<9x256xf32> to vector<1x256xf32>
    %38 = vector.broadcast %37 : vector<1x256xf32> to vector<8x256xf32>
    %39 = arith.mulf %36, %38 : vector<8x256xf32>
    %40 = tpu.concatenate %8, %12, %16, %20, %23, %27, %31, %35, %39 in 0 : vector<8x256xf32>, vector<8x256xf32>, vector<8x256xf32>, vector<8x256xf32>, vector<8x256xf32>, vector<8x256xf32>, vector<8x256xf32>, vector<8x256xf32>, vector<8x256xf32> -> vector<72x256xf32>
    %c0_4 = arith.constant 0 : index
    %c0_5 = arith.constant 0 : index
    %41 = vector.load %arg3[%c0_4, %c0_5] : memref<8x72xf32, #tpu.memory_space<vmem>>, vector<8x72xf32>
    %cst_6 = arith.constant dense<0.000000e+00> : vector<8x256xf32>
    %42 = tpu.matmul %41, %40, %cst_6 {dimension_numbers = #tpu.dot_dimension_numbers<[1], [0], [0], [1], [0, 0, 1, 1], [], []>} : vector<8x72xf32>, vector<72x256xf32>, vector<8x256xf32> -> vector<8x256xf32>
    %c0_7 = arith.constant 0 : index
    %c0_8 = arith.constant 0 : index
    %43 = vector.load %arg4[%c0_7, %c0_8] : memref<8x1xf32, #tpu.memory_space<vmem>>, vector<8x1xf32>
    %44 = vector.broadcast %43 : vector<8x1xf32> to vector<8x256xf32>
    %45 = arith.addf %42, %44 : vector<8x256xf32>
    %cst_9 = arith.constant 0.000000e+00 : f32
    %46 = vector.broadcast %cst_9 : f32 to vector<8x256xf32>
    %47 = arith.maximumf %45, %46 : vector<8x256xf32>
    %c17_i32_10 = arith.constant 17 : i32
    %48 = tpu.dynamic_rotate %47 by %c17_i32_10 dim 1 : vector<8x256xf32>, i32 -> vector<8x256xf32>
    %49 = vector.extract_strided_slice %4 {offsets = [0, 0], sizes = [1, 256], strides = [1, 1]} : vector<9x256xf32> to vector<1x256xf32>
    %50 = vector.broadcast %49 : vector<1x256xf32> to vector<8x256xf32>
    %51 = arith.mulf %48, %50 : vector<8x256xf32>
    %c16_i32_11 = arith.constant 16 : i32
    %52 = tpu.dynamic_rotate %47 by %c16_i32_11 dim 1 : vector<8x256xf32>, i32 -> vector<8x256xf32>
    %53 = vector.extract_strided_slice %4 {offsets = [1, 0], sizes = [1, 256], strides = [1, 1]} : vector<9x256xf32> to vector<1x256xf32>
    %54 = vector.broadcast %53 : vector<1x256xf32> to vector<8x256xf32>
    %55 = arith.mulf %52, %54 : vector<8x256xf32>
    %c15_i32_12 = arith.constant 15 : i32
    %56 = tpu.dynamic_rotate %47 by %c15_i32_12 dim 1 : vector<8x256xf32>, i32 -> vector<8x256xf32>
    %57 = vector.extract_strided_slice %4 {offsets = [2, 0], sizes = [1, 256], strides = [1, 1]} : vector<9x256xf32> to vector<1x256xf32>
    %58 = vector.broadcast %57 : vector<1x256xf32> to vector<8x256xf32>
    %59 = arith.mulf %56, %58 : vector<8x256xf32>
    %c1_i32_13 = arith.constant 1 : i32
    %60 = tpu.dynamic_rotate %47 by %c1_i32_13 dim 1 : vector<8x256xf32>, i32 -> vector<8x256xf32>
    %61 = vector.extract_strided_slice %4 {offsets = [3, 0], sizes = [1, 256], strides = [1, 1]} : vector<9x256xf32> to vector<1x256xf32>
    %62 = vector.broadcast %61 : vector<1x256xf32> to vector<8x256xf32>
    %63 = arith.mulf %60, %62 : vector<8x256xf32>
    %64 = vector.extract_strided_slice %4 {offsets = [4, 0], sizes = [1, 256], strides = [1, 1]} : vector<9x256xf32> to vector<1x256xf32>
    %65 = vector.broadcast %64 : vector<1x256xf32> to vector<8x256xf32>
    %66 = arith.mulf %47, %65 : vector<8x256xf32>
    %c255_i32_14 = arith.constant 255 : i32
    %67 = tpu.dynamic_rotate %47 by %c255_i32_14 dim 1 : vector<8x256xf32>, i32 -> vector<8x256xf32>
    %68 = vector.extract_strided_slice %4 {offsets = [5, 0], sizes = [1, 256], strides = [1, 1]} : vector<9x256xf32> to vector<1x256xf32>
    %69 = vector.broadcast %68 : vector<1x256xf32> to vector<8x256xf32>
    %70 = arith.mulf %67, %69 : vector<8x256xf32>
    %c241_i32_15 = arith.constant 241 : i32
    %71 = tpu.dynamic_rotate %47 by %c241_i32_15 dim 1 : vector<8x256xf32>, i32 -> vector<8x256xf32>
    %72 = vector.extract_strided_slice %4 {offsets = [6, 0], sizes = [1, 256], strides = [1, 1]} : vector<9x256xf32> to vector<1x256xf32>
    %73 = vector.broadcast %72 : vector<1x256xf32> to vector<8x256xf32>
    %74 = arith.mulf %71, %73 : vector<8x256xf32>
    %c240_i32_16 = arith.constant 240 : i32
    %75 = tpu.dynamic_rotate %47 by %c240_i32_16 dim 1 : vector<8x256xf32>, i32 -> vector<8x256xf32>
    %76 = vector.extract_strided_slice %4 {offsets = [7, 0], sizes = [1, 256], strides = [1, 1]} : vector<9x256xf32> to vector<1x256xf32>
    %77 = vector.broadcast %76 : vector<1x256xf32> to vector<8x256xf32>
    %78 = arith.mulf %75, %77 : vector<8x256xf32>
    %c239_i32_17 = arith.constant 239 : i32
    %79 = tpu.dynamic_rotate %47 by %c239_i32_17 dim 1 : vector<8x256xf32>, i32 -> vector<8x256xf32>
    %80 = vector.extract_strided_slice %4 {offsets = [8, 0], sizes = [1, 256], strides = [1, 1]} : vector<9x256xf32> to vector<1x256xf32>
    %81 = vector.broadcast %80 : vector<1x256xf32> to vector<8x256xf32>
    %82 = arith.mulf %79, %81 : vector<8x256xf32>
    %83 = tpu.concatenate %51, %55, %59, %63, %66, %70, %74, %78, %82 in 0 : vector<8x256xf32>, vector<8x256xf32>, vector<8x256xf32>, vector<8x256xf32>, vector<8x256xf32>, vector<8x256xf32>, vector<8x256xf32>, vector<8x256xf32>, vector<8x256xf32> -> vector<72x256xf32>
    %c0_18 = arith.constant 0 : index
    %c0_19 = arith.constant 0 : index
    %84 = vector.load %arg5[%c0_18, %c0_19] : memref<8x72xf32, #tpu.memory_space<vmem>>, vector<8x72xf32>
    %cst_20 = arith.constant dense<0.000000e+00> : vector<8x256xf32>
    %85 = tpu.matmul %84, %83, %cst_20 {dimension_numbers = #tpu.dot_dimension_numbers<[1], [0], [0], [1], [0, 0, 1, 1], [], []>} : vector<8x72xf32>, vector<72x256xf32>, vector<8x256xf32> -> vector<8x256xf32>
    %c0_21 = arith.constant 0 : index
    %c0_22 = arith.constant 0 : index
    %86 = vector.load %arg6[%c0_21, %c0_22] : memref<8x1xf32, #tpu.memory_space<vmem>>, vector<8x1xf32>
    %87 = vector.broadcast %86 : vector<8x1xf32> to vector<8x256xf32>
    %88 = arith.addf %85, %87 : vector<8x256xf32>
    %89 = vector.extract_strided_slice %88 {offsets = [0, 0], sizes = [4, 256], strides = [1, 1]} : vector<8x256xf32> to vector<4x256xf32>
    %90 = arith.addf %1, %89 : vector<4x256xf32>
    %c0_23 = arith.constant 0 : index
    %c0_24 = arith.constant 0 : index
    %c0_25 = arith.constant 0 : index
    %91 = vector.load %arg7[%c0_23, %c0_24, %c0_25] : memref<1x4x256xf32, #tpu.memory_space<vmem>>, vector<1x4x256xf32>
    %92 = vector.shape_cast %91 : vector<1x4x256xf32> to vector<4x256xf32>
    %93 = vector.shape_cast %90 : vector<4x256xf32> to vector<1x4x256xf32>
    tpu.vector_store %arg7[%c0_23, %c0_24, %c0_25], %93 {strides = array<i32>} : memref<1x4x256xf32, #tpu.memory_space<vmem>>, vector<1x4x256xf32>,
    return
  }
  func.func @transform_0(%arg0: i32) -> (i32, i32, i32) {
    %c0_i32 = arith.constant 0 : i32
    %c0_i32_0 = arith.constant 0 : i32
    %c0_i32_1 = arith.constant 0 : i32
    return %arg0, %c0_i32, %c0_i32_0 : i32, i32, i32
  }
  func.func @transform_1(%arg0: i32) -> (i32, i32) {
    %c0_i32 = arith.constant 0 : i32
    %c0_i32_0 = arith.constant 0 : i32
    %c0_i32_1 = arith.constant 0 : i32
    return %c0_i32, %c0_i32_0 : i32, i32
  }
  func.func @transform_2(%arg0: i32) -> (i32, i32) {
    %c0_i32 = arith.constant 0 : i32
    %c0_i32_0 = arith.constant 0 : i32
    %c0_i32_1 = arith.constant 0 : i32
    return %c0_i32, %c0_i32_0 : i32, i32
  }
  func.func @transform_3(%arg0: i32) -> (i32, i32) {
    %c0_i32 = arith.constant 0 : i32
    %c0_i32_0 = arith.constant 0 : i32
    %c0_i32_1 = arith.constant 0 : i32
    return %c0_i32, %c0_i32_0 : i32, i32
  }
  func.func @transform_4(%arg0: i32) -> (i32, i32) {
    %c0_i32 = arith.constant 0 : i32
    %c0_i32_0 = arith.constant 0 : i32
    %c0_i32_1 = arith.constant 0 : i32
    return %c0_i32, %c0_i32_0 : i32, i32
  }
  func.func @transform_5(%arg0: i32) -> (i32, i32) {
    %c0_i32 = arith.constant 0 : i32
    %c0_i32_0 = arith.constant 0 : i32
    %c0_i32_1 = arith.constant 0 : i32
    return %c0_i32, %c0_i32_0 : i32, i32
  }
  func.func @transform_6(%arg0: i32) -> (i32, i32, i32) {
    %c0_i32 = arith.constant 0 : i32
    %c0_i32_0 = arith.constant 0 : i32
    %c0_i32_1 = arith.constant 0 : i32
    return %arg0, %c0_i32, %c0_i32_0 : i32, i32, i32
  }
}

</mosaic_0001>

<llo_original>
// kernel: tpu_custom_call.1
$region0: #{tpu_custom_call.1}
  #allocation0 [shape = 'u32[]', space=smem, size = 0x4, offset = 0x4, fixed_abs, tag = 'smem constant byte address 0x4 - core index']
  #allocation1 [shape = 'u32[72,128]{1,0:T(1,128)}', space=vmem, size = 0x9000, scoped, tag = 'internal scratch']
  %s0 = inlined_call_operand.vmem [shape: f32[2,4,256], index: 0, kind: input, shape index: {}]
  %s1 = inlined_call_operand.hbm [shape: f32[9,256], index: 1, kind: input, shape index: {}]
  %s2 = inlined_call_operand.hbm [shape: f32[8,72], index: 2, kind: input, shape index: {}]
  %s3 = inlined_call_operand.vmem [shape: f32[8,1], index: 3, kind: input, shape index: {}]
  %s4 = inlined_call_operand.hbm [shape: f32[8,72], index: 4, kind: input, shape index: {}]
  %s5 = inlined_call_operand.vmem [shape: f32[8,1], index: 5, kind: input, shape index: {}]
  %s6 = inlined_call_operand.hbm [shape: f32[2,4,256], index: 6, kind: output, shape index: {}]
  %s7 = sld [smem:[#allocation0]]
  $region69: #{tpu_custom_call.1} parent=0
    _
  %s9 = ssub.s32 1, %s7
  %s10 = scalar_select 0, %s9, %s7
  $region1: #{tpu_custom_call.1} parent=0
    #allocation2 [shape = 'u8[16384]{0}', space=vmem, size = 0x4000, scoped, tag = 'input window, operand 1, single buffered']
    #allocation3 [shape = 's32[2]{0}', space=sflag, size = 0x8, scoped, tag = 'scoped memory for tpu_custom_call.1']
    #allocation4 [shape = 's32[2]{0}', space=sflag, size = 0x8, scoped, tag = 'scoped memory for tpu_custom_call.1']
    #allocation5 [shape = 'u8[4096]{0}', space=vmem, size = 0x1000, scoped, tag = 'input window, operand 2, single buffered']
    #allocation6 [shape = 's32[1]{0}', space=sflag, size = 0x4, scoped, tag = 'scoped memory for tpu_custom_call.1']
    #allocation7 [shape = 'u8[4096]{0}', space=vmem, size = 0x1000, scoped, tag = 'input window, operand 4, single buffered']
    #allocation8 [shape = 'u8[8192]{0}', space=vmem, size = 0x2000, scoped, tag = 'output window, operand 0']
    %11 = vsyncpa [#allocation3], 0
    %12 = vsyncpa [#allocation6], 0
    %13 = vsyncpa [#allocation4], 0
    %s14 = scalar_lea.sflag [#allocation4], 1
    %15 = vsyncpa %s14, 0
    loop: start=0, step=1, limit=4
    $region2: #{tpu_custom_call.1} parent=1 // loop_pre_header
      _
    $region3: #{tpu_custom_call.1} parent=1 // loop_header
      %s17 = sphi 0, %s21
      %p18 = scmp.ge.s32.totalorder %s17, 4
      %s27 = sphi 0, %s29
      %s30 = sphi 0, %s27
      %s31 = sphi 0, %s30
      %s47 = sphi 0, %s31
      %s51 = sphi 0, %s51
      %s53 = sphi 0, %s51
      %s54 = sphi 0, %s53
      %s68 = sphi 0, %s54
      %s72 = sphi 0, %s72
      %s74 = sphi 0, %s72
      %s75 = sphi 0, %s74
      %s89 = sphi 0, %s75
      %s93 = sphi 0, %s93
      %s95 = sphi 0, %s93
      %s96 = sphi 0, %s95
      %s110 = sphi 0, %s96
      %s114 = sphi 0, %s114
      %s116 = sphi 0, %s114
      %s117 = sphi 0, %s116
      %s131 = sphi 0, %s117
      %s135 = sphi 0, %s135
      %s137 = sphi 0, %s135
      %s138 = sphi 0, %s137
      %s152 = sphi 0, %s138
      %s158 = sphi 0, %s160
      %s161 = sphi 0, %s158
      %s162 = sphi 0, %s161
      %s178 = sphi 0, %s162
    $region4: #{tpu_custom_call.1} parent=1 // loop_header_branch
      %20 = sbr.rel (%p18) target = $region8
    $region5: #{tpu_custom_call.1} parent=1 // loop_body
      %s22 = ssub.s32 %s17, 1
      %s23 = ssub.s32 %s17, 2
      %s24 = sadd.s32 %s17, 1
      %s25 = ssub.s32 %s17, %s24
      %p26 = scmp.eq.s32.totalorder %s25, 0
      %s28 = sadd.s32 %s27, 1
      %s29 = scalar_select %p26, %s27, %s28
      %p32 = pneg %p26
      %p33 = scmp.eq.s32.totalorder %s17, 1
      %p34 = por %p32, %p33
      %p35 = scmp.ne.s32.totalorder %s27, %s30
      %p36 = scmp.eq.s32.totalorder %s17, 0
      %p37 = por %p35, %p36
      %p38 = scmp.ne.s32.totalorder %s27, %s30
      %p39 = scmp.eq.s32.totalorder %s22, 1
      %p40 = por %p38, %p39
      %p41 = scmp.ne.s32.totalorder %s30, %s31
      %p42 = scmp.eq.s32.totalorder %s22, 0
      %p43 = por %p41, %p42
      %p44 = scmp.ne.s32.totalorder %s30, %s31
      %p45 = scmp.eq.s32.totalorder %s23, 1
      %p46 = por %p44, %p45
      %p48 = scmp.ne.s32.totalorder %s31, %s47
      %p49 = scmp.eq.s32.totalorder %s23, 0
      %p50 = por %p48, %p49
      %s52 = sadd.s32 %s51, 1
      %p55 = scmp.eq.s32.totalorder %s17, 1
      %p56 = scmp.ne.s32.totalorder %s51, %s53
      %p57 = scmp.eq.s32.totalorder %s17, 0
      %p58 = por %p56, %p57
      %p59 = scmp.ne.s32.totalorder %s51, %s53
      %p60 = scmp.eq.s32.totalorder %s22, 1
      %p61 = por %p59, %p60
      %p62 = scmp.ne.s32.totalorder %s53, %s54
      %p63 = scmp.eq.s32.totalorder %s22, 0
      %p64 = por %p62, %p63
      %p65 = scmp.ne.s32.totalorder %s53, %s54
      %p66 = scmp.eq.s32.totalorder %s23, 1
      %p67 = por %p65, %p66
      %p69 = scmp.ne.s32.totalorder %s54, %s68
      %p70 = scmp.eq.s32.totalorder %s23, 0
      %p71 = por %p69, %p70
      %s73 = sadd.s32 %s72, 1
      %p76 = scmp.eq.s32.totalorder %s17, 1
      %p77 = scmp.ne.s32.totalorder %s72, %s74
      %p78 = scmp.eq.s32.totalorder %s17, 0
      %p79 = por %p77, %p78
      %p80 = scmp.ne.s32.totalorder %s72, %s74
      %p81 = scmp.eq.s32.totalorder %s22, 1
      %p82 = por %p80, %p81
      %p83 = scmp.ne.s32.totalorder %s74, %s75
      %p84 = scmp.eq.s32.totalorder %s22, 0
      %p85 = por %p83, %p84
      %p86 = scmp.ne.s32.totalorder %s74, %s75
      %p87 = scmp.eq.s32.totalorder %s23, 1
      %p88 = por %p86, %p87
      %p90 = scmp.ne.s32.totalorder %s75, %s89
      %p91 = scmp.eq.s32.totalorder %s23, 0
      %p92 = por %p90, %p91
      %s94 = sadd.s32 %s93, 1
      %p97 = scmp.eq.s32.totalorder %s17, 1
      %p98 = scmp.ne.s32.totalorder %s93, %s95
      %p99 = scmp.eq.s32.totalorder %s17, 0
      %p100 = por %p98, %p99
      %p101 = scmp.ne.s32.totalorder %s93, %s95
      %p102 = scmp.eq.s32.totalorder %s22, 1
      %p103 = por %p101, %p102
      %p104 = scmp.ne.s32.totalorder %s95, %s96
      %p105 = scmp.eq.s32.totalorder %s22, 0
      %p106 = por %p104, %p105
      %p107 = scmp.ne.s32.totalorder %s95, %s96
      %p108 = scmp.eq.s32.totalorder %s23, 1
      %p109 = por %p107, %p108
      %p111 = scmp.ne.s32.totalorder %s96, %s110
      %p112 = scmp.eq.s32.totalorder %s23, 0
      %p113 = por %p111, %p112
      %s115 = sadd.s32 %s114, 1
      %p118 = scmp.eq.s32.totalorder %s17, 1
      %p119 = scmp.ne.s32.totalorder %s114, %s116
      %p120 = scmp.eq.s32.totalorder %s17, 0
      %p121 = por %p119, %p120
      %p122 = scmp.ne.s32.totalorder %s114, %s116
      %p123 = scmp.eq.s32.totalorder %s22, 1
      %p124 = por %p122, %p123
      %p125 = scmp.ne.s32.totalorder %s116, %s117
      %p126 = scmp.eq.s32.totalorder %s22, 0
      %p127 = por %p125, %p126
      %p128 = scmp.ne.s32.totalorder %s116, %s117
      %p129 = scmp.eq.s32.totalorder %s23, 1
      %p130 = por %p128, %p129
      %p132 = scmp.ne.s32.totalorder %s117, %s131
      %p133 = scmp.eq.s32.totalorder %s23, 0
      %p134 = por %p132, %p133
      %s136 = sadd.s32 %s135, 1
      %p139 = scmp.eq.s32.totalorder %s17, 1
      %p140 = scmp.ne.s32.totalorder %s135, %s137
      %p141 = scmp.eq.s32.totalorder %s17, 0
      %p142 = por %p140, %p141
      %p143 = scmp.ne.s32.totalorder %s135, %s137
      %p144 = scmp.eq.s32.totalorder %s22, 1
      %p145 = por %p143, %p144
      %p146 = scmp.ne.s32.totalorder %s137, %s138
      %p147 = scmp.eq.s32.totalorder %s22, 0
      %p148 = por %p146, %p147
      %p149 = scmp.ne.s32.totalorder %s137, %s138
      %p150 = scmp.eq.s32.totalorder %s23, 1
      %p151 = por %p149, %p150
      %p153 = scmp.ne.s32.totalorder %s138, %s152
      %p154 = scmp.eq.s32.totalorder %s23, 0
      %p155 = por %p153, %p154
      %s156 = ssub.s32 %s17, %s24
      %p157 = scmp.eq.s32.totalorder %s156, 0
      %s159 = sadd.s32 %s158, 1
      %s160 = scalar_select %p157, %s158, %s159
      %p163 = pneg %p157
      %p164 = scmp.eq.s32.totalorder %s17, 1
      %p165 = por %p163, %p164
      %p166 = scmp.ne.s32.totalorder %s158, %s161
      %p167 = scmp.eq.s32.totalorder %s17, 0
      %p168 = por %p166, %p167
      %p169 = scmp.ne.s32.totalorder %s158, %s161
      %p170 = scmp.eq.s32.totalorder %s22, 1
      %p171 = por %p169, %p170
      %p172 = scmp.ne.s32.totalorder %s161, %s162
      %p173 = scmp.eq.s32.totalorder %s22, 0
      %p174 = por %p172, %p173
      %p175 = scmp.ne.s32.totalorder %s161, %s162
      %p176 = scmp.eq.s32.totalorder %s23, 1
      %p177 = por %p175, %p176
      %p179 = scmp.ne.s32.totalorder %s162, %s178
      %p180 = scmp.eq.s32.totalorder %s23, 0
      %p181 = por %p179, %p180
      %p182 = scmp.le.s32.totalorder 1, %s17
      %p183 = scmp.lt.s32.totalorder %s17, 3
      %p184 = pnand %p182, %p183
      %p185 = pneg %p184
      // Predicated region
      $region9: #{tpu_custom_call.1} parent=5 // pred_check
        _
      $region10: #{tpu_custom_call.1} parent=5 // pred_check_branch
        %187 = sbr.rel (%p184) target = $region12
      $region11: #{tpu_custom_call.1} parent=5 // pred_region
        %s188 = ssub.s32 %s17, 1
        // Predicated region
        $region13: #{tpu_custom_call.1} parent=11 // pred_check
          %p189 = pneg %p64
        $region14: #{tpu_custom_call.1} parent=11 // pred_check_branch
          %191 = sbr.rel (%p189) target = $region16
        $region15: #{tpu_custom_call.1} parent=11 // pred_region
          %193 = vsyncadd [#allocation3], 0
          %s194 = sshll.u32 %s1, 4
          %s195 = int_to_ptr.hbm [resolvable:$true] %s194
          %s196 = sshll.u32 [#allocation2], 4
          %s197 = int_to_ptr.vmem [resolvable:$true] %s196
          %202 = dma.hbm_to_vmem [thread:$0]  %s195, 512, %s197, [#allocation3], 256, 256, 16
        $region16: #{tpu_custom_call.1} parent=11 // pred_fallthru
          _
        // Predicated region
        $region17: #{tpu_custom_call.1} parent=11 // pred_check
          %p203 = pneg %p85
        $region18: #{tpu_custom_call.1} parent=11 // pred_check_branch
          %205 = sbr.rel (%p203) target = $region20
        $region19: #{tpu_custom_call.1} parent=11 // pred_region
          %207 = vsyncadd [#allocation6], 0
          %s209 = sshll.u32 %s2, 4
          %s210 = int_to_ptr.hbm [resolvable:$true] %s209
          %s211 = sshll.u32 [#allocation5], 4
          %s212 = int_to_ptr.vmem [resolvable:$true] %s211
          %214 = dma.hbm_to_vmem [thread:$0]  %s210, 128, %s212, [#allocation6]
        $region20: #{tpu_custom_call.1} parent=11 // pred_fallthru
          _
        // Predicated region
        $region21: #{tpu_custom_call.1} parent=11 // pred_check
          %p215 = pneg %p106
        $region22: #{tpu_custom_call.1} parent=11 // pred_check_branch
          %217 = sbr.rel (%p215) target = $region24
        $region23: #{tpu_custom_call.1} parent=11 // pred_region
          _
        $region24: #{tpu_custom_call.1} parent=11 // pred_fallthru
          _
        // Predicated region
        $region25: #{tpu_custom_call.1} parent=11 // pred_check
          %p218 = pneg %p127
        $region26: #{tpu_custom_call.1} parent=11 // pred_check_branch
          %220 = sbr.rel (%p218) target = $region28
        $region27: #{tpu_custom_call.1} parent=11 // pred_region
          %222 = vsyncadd [#allocation6], 0
          %s224 = sshll.u32 %s4, 4
          %s225 = int_to_ptr.hbm [resolvable:$true] %s224
          %s226 = sshll.u32 [#allocation7], 4
          %s227 = int_to_ptr.vmem [resolvable:$true] %s226
          %229 = dma.hbm_to_vmem [thread:$0]  %s225, 128, %s227, [#allocation6]
        $region28: #{tpu_custom_call.1} parent=11 // pred_fallthru
          _
        // Predicated region
        $region29: #{tpu_custom_call.1} parent=11 // pred_check
          %p230 = pneg %p148
        $region30: #{tpu_custom_call.1} parent=11 // pred_check_branch
          %232 = sbr.rel (%p230) target = $region32
        $region31: #{tpu_custom_call.1} parent=11 // pred_region
          _
        $region32: #{tpu_custom_call.1} parent=11 // pred_fallthru
          _
      $region12: #{tpu_custom_call.1} parent=5 // pred_fallthru
        _
      %p233 = scmp.lt.s32.totalorder %s17, 2
      // Predicated region
      $region33: #{tpu_custom_call.1} parent=5 // pred_check
        %p234 = pneg %p233
      $region34: #{tpu_custom_call.1} parent=5 // pred_check_branch
        %236 = sbr.rel (%p234) target = $region36
      $region35: #{tpu_custom_call.1} parent=5 // pred_region
        // Predicated region
        $region37: #{tpu_custom_call.1} parent=35 // pred_check
          %p237 = pneg %p37
        $region38: #{tpu_custom_call.1} parent=35 // pred_check_branch
          %239 = sbr.rel (%p237) target = $region40
        $region39: #{tpu_custom_call.1} parent=35 // pred_region
          %p240 = scmp.lt.s32.totalorder %s17, 1
          %s241 = scalar_select %p240, %s17, 1
          %s242 = smul.addr %s241, 2
          %s243 = smul.addr %s242, 4
          %s244 = scalar_lea.vmem %s0, %s243
        $region40: #{tpu_custom_call.1} parent=35 // pred_fallthru
          _
      $region36: #{tpu_custom_call.1} parent=5 // pred_fallthru
        _
      %p245 = scmp.le.s32.totalorder 1, %s17
      %p246 = scmp.lt.s32.totalorder %s17, 3
      %p247 = pnand %p245, %p246
      %p248 = pneg %p247
      // Predicated region
      $region41: #{tpu_custom_call.1} parent=5 // pred_check
        _
      $region42: #{tpu_custom_call.1} parent=5 // pred_check_branch
        %250 = sbr.rel (%p247) target = $region44
      $region43: #{tpu_custom_call.1} parent=5 // pred_region
        %s251 = ssub.s32 %s17, 1
        // Predicated region
        $region45: #{tpu_custom_call.1} parent=43 // pred_check
          %p252 = pneg %p64
        $region46: #{tpu_custom_call.1} parent=43 // pred_check_branch
          %254 = sbr.rel (%p252) target = $region48
        $region47: #{tpu_custom_call.1} parent=43 // pred_region
          %256 = dma.done [#allocation3], 512
        $region48: #{tpu_custom_call.1} parent=43 // pred_fallthru
          _
        // Predicated region
        $region49: #{tpu_custom_call.1} parent=43 // pred_check
          %p257 = pneg %p85
        $region50: #{tpu_custom_call.1} parent=43 // pred_check_branch
          %259 = sbr.rel (%p257) target = $region52
        $region51: #{tpu_custom_call.1} parent=43 // pred_region
          %261 = dma.done [#allocation6], 128
        $region52: #{tpu_custom_call.1} parent=43 // pred_fallthru
          _
        // Predicated region
        $region53: #{tpu_custom_call.1} parent=43 // pred_check
          %p262 = pneg %p127
        $region54: #{tpu_custom_call.1} parent=43 // pred_check_branch
          %264 = sbr.rel (%p262) target = $region56
        $region55: #{tpu_custom_call.1} parent=43 // pred_region
          %266 = dma.done [#allocation6], 128
        $region56: #{tpu_custom_call.1} parent=43 // pred_fallthru
          _
        %p267 = scmp.lt.s32.totalorder %s22, 1
        %s268 = scalar_select %p267, %s22, 1
        %s269 = smul.addr %s268, 2
        %s270 = smul.addr %s269, 4
        %s271 = scalar_lea.vmem %s0, %s270
        %p272 = pneg %p43
        %p273 = pneg %p40
        %p274 = pneg %p64
        %p275 = pneg %p61
        %p276 = pneg %p85
        %p277 = pneg %p82
        %p278 = pneg %p106
        %p279 = pneg %p103
        %p280 = pneg %p127
        %p281 = pneg %p124
        %p282 = pneg %p148
        %p283 = pneg %p145
        %p284 = pneg %p174
        %p285 = pneg %p171
        %s286 = sand.u32 %s161, 1
        %s287 = scalar_lea.sflag [#allocation4], %s286
        %s288 = sand.u32 %s161, 1
        %s289 = smul.addr %s288, 8
        %s290 = scalar_lea.vmem [#allocation8], %s289
        %p291 = scmp.lt.s32.totalorder %s22, 1
        %s292 = scalar_select %p291, %s22, 1
        %s293 = smul.addr %s292, 2
        %s294 = smul.addr %s293, 4
        %s295 = scalar_lea.vmem %s0, %s294
        %v296 = vld [vmem:[%s295] sm:$0xff]
        %298 = vst [vmem:[#allocation1] ss:$2 sm:$0xff] %v296
        %v299 = vld.sshfl [vmem:[#allocation1] sm:$0xff pattern:$0x75316420]
        %v300 = vld.sshfl [vmem:[#allocation1 + $0x8] sm:$0xff pattern:$0x75316420]
        %vm303 = vcmask 1043456
        %v304 = vsel %vm303, %v299, 0.0
        %v305 = vsel %vm303, %v300, 0.0
        %v306 = vld [vmem:[#allocation2] sm:$0xff]
        %v307 = vld [vmem:[#allocation2 + $0x8] sm:$0xff]
        %v308 = vld [vmem:[#allocation2 + $0x10] sm:$0x1]
        %v309 = vld [vmem:[#allocation2 + $0x18] sm:$0x1]
        %310 = vrot.lane.b32.xlu0 %v304, 17
        %v311 = vpop.permute.xlu0 %310
        %312 = vrot.lane.b32.xlu0 %v305, 17
        %v313 = vpop.permute.xlu0 %312
        %v314 = vlaneseq
        %v315 = vand.u32 %v314, 127
        %vm316 = vcmp.lt.s32.totalorder %v315, 17
        %v317 = vsel %vm316, %v311, %v313
        %v318 = vsel %vm316, %v313, %v311
        %v319 = vperm.slane %v306, 0
        %v320 = vperm.slane %v307, 0
        %v321 = vmul.f32 %v318, %v319
        %v322 = vmul.f32 %v317, %v320
        %323 = vrot.lane.b32.xlu0 %v304, 16
        %v324 = vpop.permute.xlu0 %323
        %325 = vrot.lane.b32.xlu0 %v305, 16
        %v326 = vpop.permute.xlu0 %325
        %vm327 = vcmp.lt.s32.totalorder %v315, 16
        %v328 = vsel %vm327, %v324, %v326
        %v329 = vsel %vm327, %v326, %v324
        %v330 = vperm.slane %v306, 1
        %v331 = vperm.slane %v307, 1
        %v332 = vmul.f32 %v329, %v330
        %v333 = vmul.f32 %v328, %v331
        %334 = vrot.lane.b32.xlu0 %v304, 15
        %v335 = vpop.permute.xlu0 %334
        %336 = vrot.lane.b32.xlu0 %v305, 15
        %v337 = vpop.permute.xlu0 %336
        %vm338 = vcmp.lt.s32.totalorder %v315, 15
        %v339 = vsel %vm338, %v335, %v337
        %v340 = vsel %vm338, %v337, %v335
        %v341 = vperm.slane %v306, 2
        %v342 = vperm.slane %v307, 2
        %v343 = vmul.f32 %v340, %v341
        %v344 = vmul.f32 %v339, %v342
        %345 = vrot.lane.b32.xlu0 %v304, 1
        %v346 = vpop.permute.xlu0 %345
        %347 = vrot.lane.b32.xlu0 %v305, 1
        %v348 = vpop.permute.xlu0 %347
        %vm349 = vcmp.lt.s32.totalorder %v315, 1
        %v350 = vsel %vm349, %v346, %v348
        %v351 = vsel %vm349, %v348, %v346
        %v352 = vperm.slane %v306, 3
        %v353 = vperm.slane %v307, 3
        %v354 = vmul.f32 %v351, %v352
        %v355 = vmul.f32 %v350, %v353
        %v356 = vperm.slane %v306, 4
        %v357 = vperm.slane %v307, 4
        %v358 = vmul.f32 %v304, %v356
        %v359 = vmul.f32 %v305, %v357
        %360 = vrot.lane.b32.xlu0 %v304, 127
        %v361 = vpop.permute.xlu0 %360
        %362 = vrot.lane.b32.xlu0 %v305, 127
        %v363 = vpop.permute.xlu0 %362
        %vm364 = vcmp.lt.s32.totalorder %v315, 127
        %v365 = vsel %vm364, %v361, %v363
        %v366 = vsel %vm364, %v363, %v361
        %v367 = vperm.slane %v306, 5
        %v368 = vperm.slane %v307, 5
        %v369 = vmul.f32 %v365, %v367
        %v370 = vmul.f32 %v366, %v368
        %371 = vrot.lane.b32.xlu0 %v304, 113
        %v372 = vpop.permute.xlu0 %371
        %373 = vrot.lane.b32.xlu0 %v305, 113
        %v374 = vpop.permute.xlu0 %373
        %vm375 = vcmp.lt.s32.totalorder %v315, 113
        %v376 = vsel %vm375, %v372, %v374
        %v377 = vsel %vm375, %v374, %v372
        %v378 = vperm.slane %v306, 6
        %v379 = vperm.slane %v307, 6
        %v380 = vmul.f32 %v376, %v378
        %v381 = vmul.f32 %v377, %v379
        %382 = vrot.lane.b32.xlu0 %v304, 112
        %v383 = vpop.permute.xlu0 %382
        %384 = vrot.lane.b32.xlu0 %v305, 112
        %v385 = vpop.permute.xlu0 %384
        %vm386 = vcmp.lt.s32.totalorder %v315, 112
        %v387 = vsel %vm386, %v383, %v385
        %v388 = vsel %vm386, %v385, %v383
        %v389 = vperm.slane %v306, 7
        %v390 = vperm.slane %v307, 7
        %v391 = vmul.f32 %v387, %v389
        %v392 = vmul.f32 %v388, %v390
        %393 = vrot.lane.b32.xlu0 %v304, 111
        %v394 = vpop.permute.xlu0 %393
        %395 = vrot.lane.b32.xlu0 %v305, 111
        %v396 = vpop.permute.xlu0 %395
        %vm397 = vcmp.lt.s32.totalorder %v315, 111
        %v398 = vsel %vm397, %v394, %v396
        %v399 = vsel %vm397, %v396, %v394
        %v400 = vperm.slane %v308, 0
        %v401 = vperm.slane %v309, 0
        %v402 = vmul.f32 %v398, %v400
        %v403 = vmul.f32 %v399, %v401
        %v404 = vld [vmem:[#allocation5] sm:$0xff]
        %v405 = vld [vmem:[%s3] sm:$0xff]
        %407 = vset.pattern.permute.xlu0 0
        %408 = vperm.xlu0 %407, %v405
        %v409 = vpop.permute.xlu0 %408
        %vm411 = vcmask 588800
        %v413 = vsel %vm411, %v404, 0
        %415 = vmatpush.msra.mxu0 0.0
        %416 = vmatpush.msra.mxu0 0.0
        %417 = vmatpush.msra.mxu0 0.0
        %418 = vmatpush.msra.mxu0 0.0
        %419 = vmatpush.msra.mxu0 0.0
        %420 = vmatpush.msra.mxu0 0.0
        %421 = vmatpush.msra.mxu0 0.0
        %422 = vmatpush.msra.mxu0 %v402
        %423 = vmatpush.msra.mxu0 %v391
        %424 = vmatpush.msra.mxu0 %v380
        %425 = vmatpush.msra.mxu0 %v369
        %426 = vmatpush.msra.mxu0 %v358
        %427 = vmatpush.msra.mxu0 %v354
        %428 = vmatpush.msra.mxu0 %v343
        %429 = vmatpush.msra.mxu0 %v332
        %430 = vmatpush.msra.mxu0 %v321
        %431 = vmatmul.f32.gmra.mxu0 %v413
        %v432 = vpop.f32.mrf.mxu0
        %v433 = vadd.f32 %v409, %v432
        %434 = vdwg.mxu0
        %435 = vmatpush.msra.mxu0 0.0
        %436 = vmatpush.msra.mxu0 0.0
        %437 = vmatpush.msra.mxu0 0.0
        %438 = vmatpush.msra.mxu0 0.0
        %439 = vmatpush.msra.mxu0 0.0
        %440 = vmatpush.msra.mxu0 0.0
        %441 = vmatpush.msra.mxu0 0.0
        %442 = vmatpush.msra.mxu0 %v403
        %443 = vmatpush.msra.mxu0 %v392
        %444 = vmatpush.msra.mxu0 %v381
        %445 = vmatpush.msra.mxu0 %v370
        %446 = vmatpush.msra.mxu0 %v359
        %447 = vmatpush.msra.mxu0 %v355
        %448 = vmatpush.msra.mxu0 %v344
        %449 = vmatpush.msra.mxu0 %v333
        %450 = vmatpush.msra.mxu0 %v322
        %451 = vmatmul.f32.gmra.mxu0 %v413
        %v452 = vpop.f32.mrf.mxu0
        %v453 = vadd.f32 %v409, %v452
        %454 = vdwg.mxu0
        %v455 = vmax.f32 %v433, 0.0
        %v456 = vmax.f32 %v453, 0.0
        %457 = vrot.lane.b32.xlu0 %v455, 17
        %v458 = vpop.permute.xlu0 %457
        %459 = vrot.lane.b32.xlu0 %v456, 17
        %v460 = vpop.permute.xlu0 %459
        %v461 = vsel %vm316, %v458, %v460
        %v462 = vsel %vm316, %v460, %v458
        %v463 = vmul.f32 %v462, %v319
        %v464 = vmul.f32 %v461, %v320
        %465 = vrot.lane.b32.xlu0 %v455, 16
        %v466 = vpop.permute.xlu0 %465
        %467 = vrot.lane.b32.xlu0 %v456, 16
        %v468 = vpop.permute.xlu0 %467
        %v469 = vsel %vm327, %v466, %v468
        %v470 = vsel %vm327, %v468, %v466
        %v471 = vmul.f32 %v470, %v330
        %v472 = vmul.f32 %v469, %v331
        %473 = vrot.lane.b32.xlu0 %v455, 15
        %v474 = vpop.permute.xlu0 %473
        %475 = vrot.lane.b32.xlu0 %v456, 15
        %v476 = vpop.permute.xlu0 %475
        %v477 = vsel %vm338, %v474, %v476
        %v478 = vsel %vm338, %v476, %v474
        %v479 = vmul.f32 %v478, %v341
        %v480 = vmul.f32 %v477, %v342
        %481 = vrot.lane.b32.xlu0 %v455, 1
        %v482 = vpop.permute.xlu0 %481
        %483 = vrot.lane.b32.xlu0 %v456, 1
        %v484 = vpop.permute.xlu0 %483
        %v485 = vsel %vm349, %v482, %v484
        %v486 = vsel %vm349, %v484, %v482
        %v487 = vmul.f32 %v486, %v352
        %v488 = vmul.f32 %v485, %v353
        %v489 = vmul.f32 %v455, %v356
        %v490 = vmul.f32 %v456, %v357
        %491 = vrot.lane.b32.xlu0 %v455, 127
        %v492 = vpop.permute.xlu0 %491
        %493 = vrot.lane.b32.xlu0 %v456, 127
        %v494 = vpop.permute.xlu0 %493
        %v495 = vsel %vm364, %v492, %v494
        %v496 = vsel %vm364, %v494, %v492
        %v497 = vmul.f32 %v495, %v367
        %v498 = vmul.f32 %v496, %v368
        %499 = vrot.lane.b32.xlu0 %v455, 113
        %v500 = vpop.permute.xlu0 %499
        %501 = vrot.lane.b32.xlu0 %v456, 113
        %v502 = vpop.permute.xlu0 %501
        %v503 = vsel %vm375, %v500, %v502
        %v504 = vsel %vm375, %v502, %v500
        %v505 = vmul.f32 %v503, %v378
        %v506 = vmul.f32 %v504, %v379
        %507 = vrot.lane.b32.xlu0 %v455, 112
        %v508 = vpop.permute.xlu0 %507
        %509 = vrot.lane.b32.xlu0 %v456, 112
        %v510 = vpop.permute.xlu0 %509
        %v511 = vsel %vm386, %v508, %v510
        %v512 = vsel %vm386, %v510, %v508
        %v513 = vmul.f32 %v511, %v389
        %v514 = vmul.f32 %v512, %v390
        %515 = vrot.lane.b32.xlu0 %v455, 111
        %v516 = vpop.permute.xlu0 %515
        %517 = vrot.lane.b32.xlu0 %v456, 111
        %v518 = vpop.permute.xlu0 %517
        %v519 = vsel %vm397, %v516, %v518
        %v520 = vsel %vm397, %v518, %v516
        %v521 = vmul.f32 %v519, %v400
        %v522 = vmul.f32 %v520, %v401
        %v523 = vld [vmem:[#allocation7] sm:$0xff]
        %v524 = vld [vmem:[%s5] sm:$0xff]
        %526 = vset.pattern.permute.xlu0 0
        %527 = vperm.xlu0 %526, %v524
        %v528 = vpop.permute.xlu0 %527
        %v531 = vsel %vm411, %v523, 0
        %533 = vmatpush.msra.mxu0 0.0
        %534 = vmatpush.msra.mxu0 0.0
        %535 = vmatpush.msra.mxu0 0.0
        %536 = vmatpush.msra.mxu0 0.0
        %537 = vmatpush.msra.mxu0 0.0
        %538 = vmatpush.msra.mxu0 0.0
        %539 = vmatpush.msra.mxu0 0.0
        %540 = vmatpush.msra.mxu0 %v521
        %541 = vmatpush.msra.mxu0 %v513
        %542 = vmatpush.msra.mxu0 %v505
        %543 = vmatpush.msra.mxu0 %v497
        %544 = vmatpush.msra.mxu0 %v489
        %545 = vmatpush.msra.mxu0 %v487
        %546 = vmatpush.msra.mxu0 %v479
        %547 = vmatpush.msra.mxu0 %v471
        %548 = vmatpush.msra.mxu0 %v463
        %549 = vmatmul.f32.gmra.mxu0 %v531
        %v550 = vpop.f32.mrf.mxu0
        %v551 = vadd.f32 %v528, %v550
        %552 = vdwg.mxu0
        %553 = vmatpush.msra.mxu0 0.0
        %554 = vmatpush.msra.mxu0 0.0
        %555 = vmatpush.msra.mxu0 0.0
        %556 = vmatpush.msra.mxu0 0.0
        %557 = vmatpush.msra.mxu0 0.0
        %558 = vmatpush.msra.mxu0 0.0
        %559 = vmatpush.msra.mxu0 0.0
        %560 = vmatpush.msra.mxu0 %v522
        %561 = vmatpush.msra.mxu0 %v514
        %562 = vmatpush.msra.mxu0 %v506
        %563 = vmatpush.msra.mxu0 %v498
        %564 = vmatpush.msra.mxu0 %v490
        %565 = vmatpush.msra.mxu0 %v488
        %566 = vmatpush.msra.mxu0 %v480
        %567 = vmatpush.msra.mxu0 %v472
        %568 = vmatpush.msra.mxu0 %v464
        %569 = vmatmul.f32.gmra.mxu0 %v531
        %v570 = vpop.f32.mrf.mxu0
        %v571 = vadd.f32 %v528, %v570
        %572 = vdwg.mxu0
        %v575 = vrot.slane %v571, 4
        %v576 = vsel %vm303, %v551, %v575
        %v578 = vadd.f32 %v296, %v576
        %579 = vst [vmem:[%s290] sm:$0xff] %v578
        %s580 = sand.u32 %s161, 1
        %s581 = scalar_lea.sflag [#allocation4], %s580
        %s582 = sand.u32 %s161, 1
        %s583 = smul.addr %s582, 8
        %s584 = scalar_lea.vmem [#allocation8], %s583
        // Predicated region
        $region57: #{tpu_custom_call.1} parent=43 // pred_check
          %p585 = pneg %p171
        $region58: #{tpu_custom_call.1} parent=43 // pred_check_branch
          %587 = sbr.rel (%p585) target = $region60
        $region59: #{tpu_custom_call.1} parent=43 // pred_region
          %589 = vsyncadd %s581, 0
          %s590 = smul.addr %s22, 2
          %s591 = smul.addr %s590, 4
          %s592 = scalar_lea.hbm %s6, %s591
          %s594 = sshll.u32 %s584, 4
          %s595 = int_to_ptr.vmem [resolvable:$true] %s594
          %s596 = sshll.u32 %s592, 4
          %s597 = int_to_ptr.hbm [resolvable:$true] %s596
          %599 = dma.vmem_to_hbm [thread:$0]  %s595, 128, %s597, %s581
        $region60: #{tpu_custom_call.1} parent=43 // pred_fallthru
          _
      $region44: #{tpu_custom_call.1} parent=5 // pred_fallthru
        _
      %p600 = scmp.le.s32.totalorder 2, %s17
      // Predicated region
      $region61: #{tpu_custom_call.1} parent=5 // pred_check
        %p601 = pneg %p600
      $region62: #{tpu_custom_call.1} parent=5 // pred_check_branch
        %603 = sbr.rel (%p601) target = $region64
      $region63: #{tpu_custom_call.1} parent=5 // pred_region
        %s604 = ssub.s32 %s17, 2
        // Predicated region
        $region65: #{tpu_custom_call.1} parent=63 // pred_check
          %p605 = pneg %p177
        $region66: #{tpu_custom_call.1} parent=63 // pred_check_branch
          %607 = sbr.rel (%p605) target = $region68
        $region67: #{tpu_custom_call.1} parent=63 // pred_region
          %s608 = sand.u32 %s162, 1
          %s609 = scalar_lea.sflag [#allocation4], %s608
          %s610 = sand.u32 %s162, 1
          %s611 = smul.addr %s610, 8
          %s612 = scalar_lea.vmem [#allocation8], %s611
          %614 = dma.done %s609, 128
        $region68: #{tpu_custom_call.1} parent=63 // pred_fallthru
          _
      $region64: #{tpu_custom_call.1} parent=5 // pred_fallthru
        _
    $region6: #{tpu_custom_call.1} parent=1 // loop_footer
      %s21 = sadd.s32 1, %s17
    $region7: #{tpu_custom_call.1} parent=1 // loop_footer_branch
      %16 = sbr.rel target = $region3
    $region8: #{tpu_custom_call.1} parent=1 // loop_exit
      _
    %615 = vsyncpa [#allocation3], 1
    %s616 = scalar_lea.sflag [#allocation3], 1
    %617 = vsyncpa %s616, 1
    %618 = vsyncpa [#allocation6], 1
    %619 = vsyncpa [#allocation4], 1
    %s620 = scalar_lea.sflag [#allocation4], 1
    %621 = vsyncpa %s620, 1

</llo_original>
